<compile_context>
chip_gen: v5e
topology: v5e:2x2
jax: 0.10.0
libtpu: 0.0.40
codegen_flags: <defaults>
</compile_context>

<pallas_src>
import jax
import jax.numpy as jnp
import numpy as np
from jax.experimental import pallas as pl
from jax.experimental.pallas import tpu as pltpu

EPS = 1e-5  # nn.BatchNorm2d default eps


def _round_up(x, m):
    return ((x + m - 1) // m) * m


# ---------------------------------------------------------------------------
# Single pass: conv (matmul with folded bias) + ReLU, emit pre-BN activations
# and per-tile partial per-channel sum / sum-of-squares.
# ---------------------------------------------------------------------------
def conv_relu_stats_kernel(w_ref, p_ref, y_ref, sum_ref, sq_ref):
    # [Cout, Kd_p](bf16) @ [Kd_p, TILE_M](bf16) -> [Cout, TILE_M] f32 (MXU).
    y = jnp.dot(w_ref[...], p_ref[...], preferred_element_type=jnp.float32)
    y = jnp.maximum(y, 0.0)               # ReLU (conv bias folded via ones-row)
    y_ref[...] = y

    # Padded patch columns are all-zero (including the bias ones-row), so the
    # corresponding y columns are exactly 0 and contribute nothing here.
    sum_ref[0, :, :] = jnp.sum(y, axis=1, keepdims=True)
    sq_ref[0, :, :] = jnp.sum(y * y, axis=1, keepdims=True)


def _im2col_transposed(x, kernel_size, stride, padding, oh, ow):
    """x: [N, Cin, H, W] -> [Cin*K*K, N*OH*OW]; kd ordered (cin, kh, kw) to
    match PyTorch OIHW weight flattening; columns ordered (n, oy, ox)."""
    n, cin, _, _ = x.shape
    xp = jnp.pad(x, ((0, 0), (0, 0), (padding, padding), (padding, padding)))
    cols = []
    for kh in range(kernel_size):
        for kw in range(kernel_size):
            cols.append(
                xp[:, :, kh:kh + stride * oh:stride, kw:kw + stride * ow:stride]
            )  # each: [N, Cin, OH, OW]
    p = jnp.stack(cols, axis=2)                          # [N, Cin, K*K, OH, OW]
    kd = cin * kernel_size * kernel_size
    p = p.reshape(n, kd, oh * ow)                        # [N, Kd, OHW]
    return jnp.transpose(p, (1, 0, 2)).reshape(kd, n * oh * ow)


def _pick_tile_m(kd_p, cout, m, budget_bytes=28 * 1024 * 1024, cap=2048):
    """Largest multiple-of-128 tile_m whose per-step VMEM footprint fits."""
    t = max(128, min(cap, _round_up(m, 128)) // 128 * 128)

    def footprint(t):
        # double-buffered bf16 patch block + double-buffered f32 y block + weight
        return 2 * kd_p * t * 2 + 2 * cout * t * 4 + cout * kd_p * 2

    while t > 128 and footprint(t) > budget_bytes:
        t -= 128
    return t


def conv2d_double_downscale(x, weight, bias, gamma, beta,
                            kernel_size=5, stride=4, padding=1, tile_m=None):
    """x: [N, Cin, H, W] f32, weight: [Cout, Cin, K, K], bias/gamma/beta: [Cout]."""
    n, cin, h, w = x.shape
    cout = weight.shape[0]
    oh = (h + 2 * padding - kernel_size) // stride + 1
    ow = (w + 2 * padding - kernel_size) // stride + 1
    ohw = oh * ow
    m = n * ohw                                   # flattened batch*spatial axis
    kd = cin * kernel_size * kernel_size
    kd_p = _round_up(kd + 1, 16)                  # +1 ones-row; bf16 sublane align

    if tile_m is None:
        tile_m = _pick_tile_m(kd_p, cout, m)
    tile_m = max(128, (tile_m // 128) * 128)
    m_p = _round_up(m, tile_m)                    # single batch-wide pad
    nt = m_p // tile_m

    # --- JAX-side patch build (transposed layout, folded bias row, bf16) -----
    p = _im2col_transposed(x, kernel_size, stride, padding, oh, ow)   # [Kd, M]
    p = jnp.concatenate([p, jnp.ones((1, m), x.dtype)], axis=0)       # bias row
    p = jnp.pad(p, ((0, kd_p - kd - 1), (0, m_p - m))).astype(jnp.bfloat16)

    w_mat = weight.reshape(cout, kd)
    w_full = jnp.concatenate([w_mat, bias.reshape(cout, 1)], axis=1)
    w_full = jnp.pad(w_full, ((0, 0), (0, kd_p - kd - 1))).astype(jnp.bfloat16)

    # --- Pallas: conv + bias + ReLU, per-tile channel sum / sumsq ------------
    y_pre, tile_sum, tile_sq = pl.pallas_call(
        conv_relu_stats_kernel,
        out_shape=(
            jax.ShapeDtypeStruct((cout, m_p), jnp.float32),
            jax.ShapeDtypeStruct((nt, cout, 1), jnp.float32),
            jax.ShapeDtypeStruct((nt, cout, 1), jnp.float32),
        ),
        grid=(nt,),
        in_specs=[
            pl.BlockSpec((cout, kd_p), lambda j: (0, 0)),
            pl.BlockSpec((kd_p, tile_m), lambda j: (0, j)),
        ],
        out_specs=(
            pl.BlockSpec((cout, tile_m), lambda j: (0, j)),
            pl.BlockSpec((1, cout, 1), lambda j: (j, 0, 0)),
            pl.BlockSpec((1, cout, 1), lambda j: (j, 0, 0)),
        ),
        compiler_params=pltpu.CompilerParams(
            dimension_semantics=("parallel",),       # no resident accumulator
            vmem_limit_bytes=48 * 1024 * 1024),
        cost_estimate=pl.CostEstimate(
            flops=2 * cout * kd_p * m_p,
            transcendentals=0,
            bytes_accessed=2 * kd_p * m_p + 2 * cout * kd_p
                           + 4 * cout * m_p + 8 * nt * cout),
    )(w_full, p)

    # --- Fold training-mode BatchNorm (batch stats, biased variance) ---------
    cnt = float(m)
    ch_sum = jnp.sum(tile_sum[:, :, 0], axis=0)            # (Cout,)
    ch_sq = jnp.sum(tile_sq[:, :, 0], axis=0)
    mean = ch_sum / cnt
    var = jnp.maximum(ch_sq / cnt - mean * mean, 0.0)
    scale = gamma * jax.lax.rsqrt(var + EPS)
    shift = beta - mean * scale

    # --- BN affine fused (by XLA) with slice / reshape / NCHW transpose ------
    y = y_pre[:, :m].reshape(cout, n, oh, ow)
    out = y * scale[:, None, None, None] + shift[:, None, None, None]
    return jnp.transpose(out, (1, 0, 2, 3))                # (N, Cout, OH, OW)


def _reference(x, weight, bias, gamma, beta, stride=4, padding=1):
    y = jax.lax.conv_general_dilated(
        x, weight, window_strides=(stride, stride),
        padding=((padding, padding), (padding, padding)),
        dimension_numbers=("NCHW", "OIHW", "NCHW"))
    y = y + bias.reshape(1, -1, 1, 1)
    y = jnp.maximum(y, 0.0)
    mean = y.mean(axis=(0, 2, 3), keepdims=True)
    var = ((y - mean) ** 2).mean(axis=(0, 2, 3), keepdims=True)
    return (y - mean) / jnp.sqrt(var + EPS) * gamma.reshape(1, -1, 1, 1) \
        + beta.reshape(1, -1, 1, 1)


if __name__ == "__main__":
    key = jax.random.PRNGKey(0)
    k_x, k_w, k_b = jax.random.split(key, 3)

    N, Cin, H, W = 2, 4, 16, 16
    Cout, K = 8, 5

    x = jax.random.normal(k_x, (N, Cin, H, W), dtype=jnp.float32)
    weight = 0.1 * jax.random.normal(k_w, (Cout, Cin, K, K), dtype=jnp.float32)
    bias = 0.01 * jax.random.normal(k_b, (Cout,), dtype=jnp.float32)
    gamma = jnp.ones((Cout,), dtype=jnp.float32)   # BatchNorm weight init
    beta = jnp.zeros((Cout,), dtype=jnp.float32)   # BatchNorm bias init

    fwd = jax.jit(lambda x, w, b, g, bt: conv2d_double_downscale(x, w, b, g, bt))
    out = jax.block_until_ready(fwd(x, weight, bias, gamma, beta))

    ref = _reference(x, weight, bias, gamma, beta)
    assert out.shape == (N, Cout, H // 4, W // 4), out.shape
    # bf16 matmul operands (f32 accumulation) -> loosened tolerance.
    np.testing.assert_allclose(np.asarray(out), np.asarray(ref),
                               rtol=2e-2, atol=2e-2)
    print("KERNEL_OK")
</pallas_src>

<mosaic_0001>
module attributes {stable_mosaic.version = 11 : i64} {
  func.func @conv_relu_stats_kernel(%arg0: i32, %arg1: memref<8x112xbf16, #tpu.memory_space<vmem>>, %arg2: memref<112x128xbf16, #tpu.memory_space<vmem>>, %arg3: memref<8x128xf32, #tpu.memory_space<vmem>>, %arg4: memref<1x8x1xf32, #tpu.memory_space<vmem>>, %arg5: memref<1x8x1xf32, #tpu.memory_space<vmem>>) attributes {dimension_semantics = [#tpu.dimension_semantics<parallel>], iteration_bounds = array<i64: 1>, scalar_prefetch = 0 : i64, scratch_operands = 0 : i64, tpu.core_type = #tpu.core_type<tc>, window_params = [{pipeline_mode = #tpu.pipeline_mode<synchronous>, transform_indices = @transform_0, window_bounds = array<i64: 8, 112>}, {transform_indices = @transform_1, window_bounds = array<i64: 112, 128>}, {transform_indices = @transform_2, window_bounds = array<i64: 8, 128>}, {transform_indices = @transform_3, window_bounds = array<i64: 1, 8, 1>}, {transform_indices = @transform_4, window_bounds = array<i64: 1, 8, 1>}]} {
    %c0 = arith.constant 0 : index
    %c0_0 = arith.constant 0 : index
    %0 = vector.load %arg1[%c0, %c0_0] : memref<8x112xbf16, #tpu.memory_space<vmem>>, vector<8x112xbf16>
    %c0_1 = arith.constant 0 : index
    %c0_2 = arith.constant 0 : index
    %1 = vector.load %arg2[%c0_1, %c0_2] : memref<112x128xbf16, #tpu.memory_space<vmem>>, vector<112x128xbf16>
    %cst = arith.constant dense<0.000000e+00> : vector<8x128xf32>
    %2 = tpu.matmul %0, %1, %cst {dimension_numbers = #tpu.dot_dimension_numbers<[1], [0], [0], [1], [0, 0, 1, 1], [], []>} : vector<8x112xbf16>, vector<112x128xbf16>, vector<8x128xf32> -> vector<8x128xf32>
    %cst_3 = arith.constant 0.000000e+00 : f32
    %3 = vector.broadcast %cst_3 : f32 to vector<8x128xf32>
    %4 = arith.maximumf %2, %3 : vector<8x128xf32>
    %c0_4 = arith.constant 0 : index
    %c0_5 = arith.constant 0 : index
    %5 = vector.load %arg3[%c0_4, %c0_5] : memref<8x128xf32, #tpu.memory_space<vmem>>, vector<8x128xf32>
    tpu.vector_store %arg3[%c0_4, %c0_5], %4 {strides = array<i32>} : memref<8x128xf32, #tpu.memory_space<vmem>>, vector<8x128xf32>,
    %cst_6 = arith.constant dense<0.000000e+00> : vector<8xf32>
    %6 = vector.multi_reduction <add>, %4, %cst_6 [1] : vector<8x128xf32> to vector<8xf32>
    %7 = vector.shape_cast %6 : vector<8xf32> to vector<8x1xf32>
    %c0_7 = arith.constant 0 : index
    %c0_8 = arith.constant 0 : index
    %c0_9 = arith.constant 0 : index
    %8 = vector.load %arg4[%c0_7, %c0_8, %c0_9] : memref<1x8x1xf32, #tpu.memory_space<vmem>>, vector<1x8x1xf32>
    %9 = vector.shape_cast %8 : vector<1x8x1xf32> to vector<8x1xf32>
    %10 = vector.shape_cast %7 : vector<8x1xf32> to vector<1x8x1xf32>
    tpu.vector_store %arg4[%c0_7, %c0_8, %c0_9], %10 {strides = array<i32>} : memref<1x8x1xf32, #tpu.memory_space<vmem>>, vector<1x8x1xf32>,
    %11 = arith.mulf %4, %4 : vector<8x128xf32>
    %cst_10 = arith.constant dense<0.000000e+00> : vector<8xf32>
    %12 = vector.multi_reduction <add>, %11, %cst_10 [1] : vector<8x128xf32> to vector<8xf32>
    %13 = vector.shape_cast %12 : vector<8xf32> to vector<8x1xf32>
    %c0_11 = arith.constant 0 : index
    %c0_12 = arith.constant 0 : index
    %c0_13 = arith.constant 0 : index
    %14 = vector.load %arg5[%c0_11, %c0_12, %c0_13] : memref<1x8x1xf32, #tpu.memory_space<vmem>>, vector<1x8x1xf32>
    %15 = vector.shape_cast %14 : vector<1x8x1xf32> to vector<8x1xf32>
    %16 = vector.shape_cast %13 : vector<8x1xf32> to vector<1x8x1xf32>
    tpu.vector_store %arg5[%c0_11, %c0_12, %c0_13], %16 {strides = array<i32>} : memref<1x8x1xf32, #tpu.memory_space<vmem>>, vector<1x8x1xf32>,
    return
  }
  func.func @transform_0(%arg0: i32) -> (i32, i32) {
    %c0_i32 = arith.constant 0 : i32
    %c0_i32_0 = arith.constant 0 : i32
    %c0_i32_1 = arith.constant 0 : i32
    return %c0_i32, %c0_i32_0 : i32, i32
  }
  func.func @transform_1(%arg0: i32) -> (i32, i32) {
    %c0_i32 = arith.constant 0 : i32
    %c0_i32_0 = arith.constant 0 : i32
    return %c0_i32, %arg0 : i32, i32
  }
  func.func @transform_2(%arg0: i32) -> (i32, i32) {
    %c0_i32 = arith.constant 0 : i32
    %c0_i32_0 = arith.constant 0 : i32
    return %c0_i32, %arg0 : i32, i32
  }
  func.func @transform_3(%arg0: i32) -> (i32, i32, i32) {
    %c0_i32 = arith.constant 0 : i32
    %c0_i32_0 = arith.constant 0 : i32
    %c0_i32_1 = arith.constant 0 : i32
    return %arg0, %c0_i32, %c0_i32_0 : i32, i32, i32
  }
  func.func @transform_4(%arg0: i32) -> (i32, i32, i32) {
    %c0_i32 = arith.constant 0 : i32
    %c0_i32_0 = arith.constant 0 : i32
    %c0_i32_1 = arith.constant 0 : i32
    return %arg0, %c0_i32, %c0_i32_0 : i32, i32, i32
  }
}

</mosaic_0001>

<llo_original>
// kernel: _lambda_.1
$region0: #{_lambda_.1}
  #allocation0 [shape = 'u32[]', space=smem, size = 0x4, offset = 0x4, fixed_abs, tag = 'smem constant byte address 0x4 - core index']
  #allocation1 [shape = 'u32[72,128]{1,0:T(1,128)}', space=vmem, size = 0x9000, scoped, tag = 'internal scratch']
  %s0 = inlined_call_operand.vmem [shape: bf16[8,112], index: 0, kind: input, shape index: {}]
  %s1 = inlined_call_operand.vmem [shape: bf16[112,128], index: 1, kind: input, shape index: {}]
  %s2 = inlined_call_operand.vmem [shape: f32[8,128], index: 2, kind: output, shape index: {0}]
  %s3 = inlined_call_operand.vmem [shape: f32[1,8,1], index: 3, kind: output, shape index: {1}]
  %s4 = inlined_call_operand.vmem [shape: f32[1,8,1], index: 4, kind: output, shape index: {2}]
  %5 = xla_tuple %s2, %s3, %s4
  %s6 = sld [smem:[#allocation0]]
  $region34: #{_lambda_.1} parent=0
    _
  %s8 = ssub.s32 1, %s6
  %s9 = scalar_select 0, %s8, %s6
  // Predicated region
  $region2: #{_lambda_.1} parent=0 // pred_check
    _
  $region3: #{_lambda_.1} parent=0 // pred_check_branch
    %11 = sbr.rel (0) target = $region5
  $region4: #{_lambda_.1} parent=0 // pred_region
    _
  $region5: #{_lambda_.1} parent=0 // pred_fallthru
    _
  // Predicated region
  $region6: #{_lambda_.1} parent=0 // pred_check
    _
  $region7: #{_lambda_.1} parent=0 // pred_check_branch
    %13 = sbr.rel (0) target = $region9
  $region8: #{_lambda_.1} parent=0 // pred_region
    _
  $region9: #{_lambda_.1} parent=0 // pred_fallthru
    _
  %v15 = vld [vmem:[%s0] sm:$0xf]
  %v16 = vld [vmem:[%s1] sm:$0xf]
  %v17 = vld [vmem:[%s1 + $0x4] sm:$0xf]
  %v18 = vld [vmem:[%s1 + $0x8] sm:$0xf]
  %v19 = vld [vmem:[%s1 + $0xc] sm:$0xf]
  %v20 = vld [vmem:[%s1 + $0x10] sm:$0xf]
  %v21 = vld [vmem:[%s1 + $0x14] sm:$0xf]
  %v22 = vld [vmem:[%s1 + $0x18] sm:$0xf]
  %v23 = vld [vmem:[%s1 + $0x1c] sm:$0xf]
  %v24 = vld [vmem:[%s1 + $0x20] sm:$0xf]
  %v25 = vld [vmem:[%s1 + $0x24] sm:$0xf]
  %v26 = vld [vmem:[%s1 + $0x28] sm:$0xf]
  %v27 = vld [vmem:[%s1 + $0x2c] sm:$0xf]
  %v28 = vld [vmem:[%s1 + $0x30] sm:$0xf]
  %v29 = vld [vmem:[%s1 + $0x34] sm:$0xf]
  %v44 = vunpack.c.l.b16 %v16
  %v45 = vunpack.c.l.b16 %v17
  %v46 = vunpack.c.l.b16 %v18
  %v47 = vunpack.c.l.b16 %v19
  %v48 = vunpack.c.l.b16 %v20
  %v49 = vunpack.c.l.b16 %v21
  %v50 = vunpack.c.l.b16 %v22
  %v51 = vunpack.c.l.b16 %v23
  %v52 = vunpack.c.l.b16 %v24
  %v53 = vunpack.c.l.b16 %v25
  %v54 = vunpack.c.l.b16 %v26
  %v55 = vunpack.c.l.b16 %v27
  %v56 = vunpack.c.l.b16 %v28
  %v57 = vunpack.c.l.b16 %v29
  %v58 = vpack.c.b16 %v45, %v44
  %v59 = vpack.c.b16 %v47, %v46
  %v60 = vpack.c.b16 %v49, %v48
  %v61 = vpack.c.b16 %v51, %v50
  %v62 = vpack.c.b16 %v53, %v52
  %v63 = vpack.c.b16 %v55, %v54
  %v64 = vpack.c.b16 %v57, %v56
  %vm72 = vcmask 916480
  %v74 = vsel %vm72, %v15, 0
  %76 = vmatpush.bf16.msra.mxu0 0
  %77 = vmatpush.bf16.msra.mxu0 %v64
  %78 = vmatpush.bf16.msra.mxu0 %v63
  %79 = vmatpush.bf16.msra.mxu0 %v62
  %80 = vmatpush.bf16.msra.mxu0 %v61
  %81 = vmatpush.bf16.msra.mxu0 %v60
  %82 = vmatpush.bf16.msra.mxu0 %v59
  %83 = vmatpush.bf16.msra.mxu0 %v58
  %84 = vmatmul.bf16.gmra.mxu0 %v74
  %v85 = vpop.f32.mrf.mxu0
  %v86 = vadd.f32 0.0, %v85
  %v87 = vpop.f32.mrf.mxu0
  %88 = vdwg.mxu0
  %v89 = vmax.f32 %v86, 0.0
  %90 = vst [vmem:[%s2] sm:$0xff] %v89
  %91 = vadd.xlane.f32.xlu0 %v89
  %v92 = vpop.xlane.xlu0 %91
  %vm93 = vcmask 7168
  %94 = vst.msk [vmem:[%s3] sm:$0xff] %vm93, %v92
  %v95 = vmul.f32 %v89, %v89
  %96 = vadd.xlane.f32.xlu0 %v95
  %v97 = vpop.xlane.xlu0 %96
  %98 = vst.msk [vmem:[%s4] sm:$0xff] %vm93, %v97
  // Predicated region
  $region10: #{_lambda_.1} parent=0 // pred_check
    _
  $region11: #{_lambda_.1} parent=0 // pred_check_branch
    %100 = sbr.rel (0) target = $region13
  $region12: #{_lambda_.1} parent=0 // pred_region
    _
  $region13: #{_lambda_.1} parent=0 // pred_fallthru
    _
  // Predicated region
  $region14: #{_lambda_.1} parent=0 // pred_check
    _
  $region15: #{_lambda_.1} parent=0 // pred_check_branch
    %102 = sbr.rel (0) target = $region17
  $region16: #{_lambda_.1} parent=0 // pred_region
    _
  $region17: #{_lambda_.1} parent=0 // pred_fallthru
    _
  // Predicated region
  $region18: #{_lambda_.1} parent=0 // pred_check
    _
  $region19: #{_lambda_.1} parent=0 // pred_check_branch
    %104 = sbr.rel (0) target = $region21
  $region20: #{_lambda_.1} parent=0 // pred_region
    _
  $region21: #{_lambda_.1} parent=0 // pred_fallthru
    _
  // Predicated region
  $region22: #{_lambda_.1} parent=0 // pred_check
    _
  $region23: #{_lambda_.1} parent=0 // pred_check_branch
    %106 = sbr.rel (0) target = $region25
  $region24: #{_lambda_.1} parent=0 // pred_region
    _
  $region25: #{_lambda_.1} parent=0 // pred_fallthru
    _
  // Predicated region
  $region26: #{_lambda_.1} parent=0 // pred_check
    _
  $region27: #{_lambda_.1} parent=0 // pred_check_branch
    %108 = sbr.rel (0) target = $region29
  $region28: #{_lambda_.1} parent=0 // pred_region
    _
  $region29: #{_lambda_.1} parent=0 // pred_fallthru
    _
  // Predicated region
  $region30: #{_lambda_.1} parent=0 // pred_check
    _
  $region31: #{_lambda_.1} parent=0 // pred_check_branch
    %110 = sbr.rel (0) target = $region33
  $region32: #{_lambda_.1} parent=0 // pred_region
    _
  $region33: #{_lambda_.1} parent=0 // pred_fallthru
    _

</llo_original>
